<compile_context>
chip_gen: v5e
topology: v5e:2x2
jax: 0.10.0
libtpu: 0.0.40
codegen_flags: <defaults>
</compile_context>

<pallas_src>
import functools

import jax
import jax.numpy as jnp
from jax.experimental import pallas as pl
from jax.experimental.pallas import tpu as pltpu

# Layer widths of Module_1: 1 -> 5 -> 10 x7 -> 5 -> 1
DIMS = [1, 5, 10, 10, 10, 10, 10, 10, 10, 5, 1]
N_LAYERS = len(DIMS) - 1      # 10 linear layers
N_MM = N_LAYERS - 2           # layers 1..8 run on the MXU
FPAD = 128                    # padded feature width (one lane tile)
ONE_LANE = FPAD - 1           # lane carrying the constant 1.0 (>= max real d_out)


def _round_up(a, b):
    return ((a + b - 1) // b) * b


def _chip_flags():
    """(dual_tensorcore, bf16_valu) from the local device kind; safe fallbacks."""
    kind = ""
    try:
        kind = (jax.devices()[0].device_kind or "").lower()
    except Exception:
        pass
    dual_tc = "v7" in kind                            # v7x: 2 TCs share the grid
    bf16_valu = ("v6" in kind) or ("v7" in kind)      # bf16 VPU on v6e/v7x only
    return dual_tc, bf16_valu


def mlp_kernel(x_ref, w0_ref, b0_ref, w_ref, w9_ref, o_ref, *, bf16_act):
    # x_ref : (TM, 1)              f32   raw input column
    # w0_ref: (1, FPAD)            f32   layer-0 weight row (zero padded)
    # b0_ref: (1, FPAD)            f32   layer-0 bias row, lane ONE_LANE == 1.0
    # w_ref : (N_MM, FPAD, FPAD)   bf16  layers 1..8; bias folded into row ONE_LANE
    # w9_ref: (1, FPAD)            f32   final weight row; lane ONE_LANE == bias_9
    # o_ref : (TM, 1)              f32
    #
    # Layer 0 on the VPU: Linear(1, 5) is a broadcast multiply-add; lane
    # ONE_LANE comes out of the ReLU as 1.0 and carries the folded biases.
    h = jnp.maximum(x_ref[...] * w0_ref[...] + b0_ref[...], 0.0)   # (TM, FPAD) f32
    if bf16_act:
        h = h.astype(jnp.bfloat16)
    acc_dtype = jnp.bfloat16 if bf16_act else jnp.float32
    # Layers 1..8 on the MXU; bias add happens inside the f32 accumulation via
    # the constant-1 lane, so there is no per-layer VALU broadcast add.
    for l in range(N_MM):
        h = jnp.dot(h.astype(jnp.bfloat16), w_ref[l],
                    preferred_element_type=acc_dtype)
        h = jnp.maximum(h, 0.0)                # ReLU; lane ONE_LANE stays 1.0
    # Final Linear(5, 1) on the VPU + XLU: multiply by the single weight row
    # and lane-reduce; bias_9 rides on lane ONE_LANE (h[:, ONE_LANE] == 1).
    o_ref[...] = jnp.sum(h.astype(jnp.float32) * w9_ref[...],
                         axis=-1, keepdims=True)


def mlp_forward(x, weights, biases, *, tm=4096):
    """x: (N, 1) f32.  weights[l]: (d_in, d_out) f32.  biases[l]: (d_out,) f32."""
    n = x.shape[0]
    n8 = _round_up(max(n, 1), 8)
    dual_tc, bf16_act = _chip_flags()

    # Row tile: multiple of 8, no bigger than the padded data.  Only dual-TC
    # chips (v7x) benefit from >= 2 grid steps; single-TC v5e/v6e take the
    # whole batch in one step when it fits (halves fixed per-step overhead).
    tm = max(8, (min(tm, n8) // 8) * 8)
    if dual_tc and n8 >= 16:
        tm = min(tm, _round_up((n8 + 1) // 2, 8))
    n_pad = _round_up(n, tm)

    # Slim input: (n_pad, 1) — no 128-lane padding at the pallas_call boundary.
    x_p = jnp.zeros((n_pad, 1), jnp.float32).at[:n, :].set(x)

    # Layer-0 weight row (f32) and bias row carrying the constant-1 lane.
    w0_p = jnp.zeros((1, FPAD), jnp.float32).at[:, :DIMS[1]].set(weights[0])
    b0_p = (jnp.zeros((1, FPAD), jnp.float32)
            .at[0, :DIMS[1]].set(biases[0])
            .at[0, ONE_LANE].set(1.0))

    # Layers 1..8: zero-padded weights with the bias folded into row ONE_LANE
    # and W[ONE_LANE, ONE_LANE] = 1 so the constant self-propagates; bf16 once.
    w_stack = jnp.zeros((N_MM, FPAD, FPAD), jnp.float32)
    for l in range(1, N_LAYERS - 1):
        w_stack = (w_stack
                   .at[l - 1, :DIMS[l], :DIMS[l + 1]].set(weights[l])
                   .at[l - 1, ONE_LANE, :DIMS[l + 1]].set(biases[l])
                   .at[l - 1, ONE_LANE, ONE_LANE].set(1.0))
    w_stack = w_stack.astype(jnp.bfloat16)

    # Final Linear(5, 1) as a single f32 row; its bias sits on the const lane.
    w9_p = (jnp.zeros((1, FPAD), jnp.float32)
            .at[0, :DIMS[-2]].set(weights[-1][:, 0])
            .at[0, ONE_LANE].set(biases[-1][0]))

    grid = (n_pad // tm,)
    kernel = functools.partial(mlp_kernel, bf16_act=bf16_act)
    out_p = pl.pallas_call(
        kernel,
        out_shape=jax.ShapeDtypeStruct((n_pad, 1), jnp.float32),
        grid_spec=pltpu.PrefetchScalarGridSpec(
            num_scalar_prefetch=0,
            grid=grid,
            in_specs=[
                pl.BlockSpec((tm, 1), lambda i: (i, 0)),                # x
                pl.BlockSpec((1, FPAD), lambda i: (0, 0)),              # w0 row
                pl.BlockSpec((1, FPAD), lambda i: (0, 0)),              # b0 row
                # Constant index_maps: weights are fetched once and stay
                # resident across the grid (~0.26 MiB bf16 — VMEM headroom is
                # huge, so no Buffered()/vmem_limit_bytes tweaks are needed).
                pl.BlockSpec((N_MM, FPAD, FPAD), lambda i: (0, 0, 0)),  # w1..w8
                pl.BlockSpec((1, FPAD), lambda i: (0, 0)),              # w9 row
            ],
            out_specs=pl.BlockSpec((tm, 1), lambda i: (i, 0)),
        ),
        compiler_params=pltpu.CompilerParams(
            dimension_semantics=("parallel",)),     # row tiles shard across TCs
    )(x_p, w0_p, b0_p, w_stack, w9_p)

    return out_p[:n]


def init_params(key):
    """Deterministic parameter init (mimics torch.nn.Linear uniform init)."""
    weights, biases = [], []
    for l in range(N_LAYERS):
        d_in, d_out = DIMS[l], DIMS[l + 1]
        key, kw, kb = jax.random.split(key, 3)
        bound = 1.0 / (d_in ** 0.5)
        weights.append(jax.random.uniform(kw, (d_in, d_out), jnp.float32, -bound, bound))
        biases.append(jax.random.uniform(kb, (d_out,), jnp.float32, -bound, bound))
    return weights, biases


def mlp_reference(x, weights, biases):
    """Exact f32 reference (original module semantics)."""
    h = x
    for l in range(N_LAYERS):
        h = h @ weights[l] + biases[l]
        if l < N_LAYERS - 1:
            h = jnp.maximum(h, 0.0)
    return h


def mlp_reference_kernel_numerics(x, weights, biases, bf16_act):
    """Emulates kernel numerics: layer 0 in f32 on the VPU, layers 1..8 with
    bf16 operands + bf16 (folded) bias and f32 MXU accumulation, optional bf16
    activation storage, final layer as an f32 row dot + f32 bias."""
    h = jnp.maximum(x @ weights[0] + biases[0], 0.0)
    if bf16_act:
        h = h.astype(jnp.bfloat16)
    for l in range(1, N_LAYERS - 1):
        w = weights[l].astype(jnp.bfloat16)
        b = biases[l].astype(jnp.bfloat16).astype(jnp.float32)
        h = jnp.dot(h.astype(jnp.bfloat16), w,
                    preferred_element_type=jnp.float32) + b
        if bf16_act:
            h = h.astype(jnp.bfloat16)
        h = jnp.maximum(h, 0.0)
    hf = h.astype(jnp.float32)
    return hf @ weights[-1] + biases[-1]


if __name__ == "__main__":
    key = jax.random.PRNGKey(0)
    kx, kp = jax.random.split(key)
    weights, biases = init_params(kp)
    _, bf16_act = _chip_flags()

    # Two shapes: tiny single-tile batch, and a padded multi-tile-capable batch.
    for n in (8, 300):
        x = jax.random.normal(jax.random.fold_in(kx, n), (n, 1), jnp.float32)
        out = jax.block_until_ready(mlp_forward(x, weights, biases))
        assert out.shape == (n, 1), out.shape

        ref_k = mlp_reference_kernel_numerics(x, weights, biases, bf16_act)
        ref_f = mlp_reference(x, weights, biases)
        assert jnp.allclose(out, ref_k, atol=2e-3, rtol=2e-3), (
            n, float(jnp.abs(out - ref_k).max()))
        assert jnp.allclose(out, ref_f, atol=1.5e-1, rtol=1.5e-1), (
            n, float(jnp.abs(out - ref_f).max()))

    print("KERNEL_OK")
</pallas_src>

<mosaic_0001>
module attributes {stable_mosaic.version = 11 : i64} {
  func.func @mlp_kernel(%arg0: i32, %arg1: memref<8x1xf32, #tpu.memory_space<vmem>>, %arg2: memref<1x128xf32, #tpu.memory_space<vmem>>, %arg3: memref<1x128xf32, #tpu.memory_space<vmem>>, %arg4: memref<8x128x128xbf16, #tpu.memory_space<vmem>>, %arg5: memref<1x128xf32, #tpu.memory_space<vmem>>, %arg6: memref<8x1xf32, #tpu.memory_space<vmem>>) attributes {dimension_semantics = [#tpu.dimension_semantics<parallel>], iteration_bounds = array<i64: 1>, scalar_prefetch = 0 : i64, scratch_operands = 0 : i64, tpu.core_type = #tpu.core_type<tc>, window_params = [{transform_indices = @transform_0, window_bounds = array<i64: 8, 1>}, {pipeline_mode = #tpu.pipeline_mode<synchronous>, transform_indices = @transform_1, window_bounds = array<i64: 1, 128>}, {pipeline_mode = #tpu.pipeline_mode<synchronous>, transform_indices = @transform_2, window_bounds = array<i64: 1, 128>}, {pipeline_mode = #tpu.pipeline_mode<synchronous>, transform_indices = @transform_3, window_bounds = array<i64: 8, 128, 128>}, {pipeline_mode = #tpu.pipeline_mode<synchronous>, transform_indices = @transform_4, window_bounds = array<i64: 1, 128>}, {transform_indices = @transform_5, window_bounds = array<i64: 8, 1>}]} {
    %c0 = arith.constant 0 : index
    %c0_0 = arith.constant 0 : index
    %0 = vector.load %arg1[%c0, %c0_0] : memref<8x1xf32, #tpu.memory_space<vmem>>, vector<8x1xf32>
    %c0_1 = arith.constant 0 : index
    %c0_2 = arith.constant 0 : index
    %1 = vector.load %arg2[%c0_1, %c0_2] : memref<1x128xf32, #tpu.memory_space<vmem>>, vector<1x128xf32>
    %2 = vector.broadcast %0 : vector<8x1xf32> to vector<8x128xf32>
    %3 = vector.broadcast %1 : vector<1x128xf32> to vector<8x128xf32>
    %4 = arith.mulf %2, %3 : vector<8x128xf32>
    %c0_3 = arith.constant 0 : index
    %c0_4 = arith.constant 0 : index
    %5 = vector.load %arg3[%c0_3, %c0_4] : memref<1x128xf32, #tpu.memory_space<vmem>>, vector<1x128xf32>
    %6 = vector.broadcast %5 : vector<1x128xf32> to vector<8x128xf32>
    %7 = arith.addf %4, %6 : vector<8x128xf32>
    %cst = arith.constant 0.000000e+00 : f32
    %8 = vector.broadcast %cst : f32 to vector<8x128xf32>
    %9 = arith.maximumf %7, %8 : vector<8x128xf32>
    %10 = arith.truncf %9 : vector<8x128xf32> to vector<8x128xbf16>
    %c0_5 = arith.constant 0 : index
    %c0_6 = arith.constant 0 : index
    %c0_7 = arith.constant 0 : index
    %11 = vector.load %arg4[%c0_5, %c0_6, %c0_7] : memref<8x128x128xbf16, #tpu.memory_space<vmem>>, vector<1x128x128xbf16>
    %12 = vector.shape_cast %11 : vector<1x128x128xbf16> to vector<128x128xbf16>
    %cst_8 = arith.constant dense<0.000000e+00> : vector<8x128xf32>
    %13 = tpu.matmul %10, %12, %cst_8 {dimension_numbers = #tpu.dot_dimension_numbers<[1], [0], [0], [1], [0, 0, 1, 1], [], []>} : vector<8x128xbf16>, vector<128x128xbf16>, vector<8x128xf32> -> vector<8x128xf32>
    %cst_9 = arith.constant 0.000000e+00 : f32
    %14 = vector.broadcast %cst_9 : f32 to vector<8x128xf32>
    %15 = arith.maximumf %13, %14 : vector<8x128xf32>
    %16 = arith.truncf %15 : vector<8x128xf32> to vector<8x128xbf16>
    %c1 = arith.constant 1 : index
    %c0_10 = arith.constant 0 : index
    %c0_11 = arith.constant 0 : index
    %17 = vector.load %arg4[%c1, %c0_10, %c0_11] : memref<8x128x128xbf16, #tpu.memory_space<vmem>>, vector<1x128x128xbf16>
    %18 = vector.shape_cast %17 : vector<1x128x128xbf16> to vector<128x128xbf16>
    %cst_12 = arith.constant dense<0.000000e+00> : vector<8x128xf32>
    %19 = tpu.matmul %16, %18, %cst_12 {dimension_numbers = #tpu.dot_dimension_numbers<[1], [0], [0], [1], [0, 0, 1, 1], [], []>} : vector<8x128xbf16>, vector<128x128xbf16>, vector<8x128xf32> -> vector<8x128xf32>
    %cst_13 = arith.constant 0.000000e+00 : f32
    %20 = vector.broadcast %cst_13 : f32 to vector<8x128xf32>
    %21 = arith.maximumf %19, %20 : vector<8x128xf32>
    %22 = arith.truncf %21 : vector<8x128xf32> to vector<8x128xbf16>
    %c2 = arith.constant 2 : index
    %c0_14 = arith.constant 0 : index
    %c0_15 = arith.constant 0 : index
    %23 = vector.load %arg4[%c2, %c0_14, %c0_15] : memref<8x128x128xbf16, #tpu.memory_space<vmem>>, vector<1x128x128xbf16>
    %24 = vector.shape_cast %23 : vector<1x128x128xbf16> to vector<128x128xbf16>
    %cst_16 = arith.constant dense<0.000000e+00> : vector<8x128xf32>
    %25 = tpu.matmul %22, %24, %cst_16 {dimension_numbers = #tpu.dot_dimension_numbers<[1], [0], [0], [1], [0, 0, 1, 1], [], []>} : vector<8x128xbf16>, vector<128x128xbf16>, vector<8x128xf32> -> vector<8x128xf32>
    %cst_17 = arith.constant 0.000000e+00 : f32
    %26 = vector.broadcast %cst_17 : f32 to vector<8x128xf32>
    %27 = arith.maximumf %25, %26 : vector<8x128xf32>
    %28 = arith.truncf %27 : vector<8x128xf32> to vector<8x128xbf16>
    %c3 = arith.constant 3 : index
    %c0_18 = arith.constant 0 : index
    %c0_19 = arith.constant 0 : index
    %29 = vector.load %arg4[%c3, %c0_18, %c0_19] : memref<8x128x128xbf16, #tpu.memory_space<vmem>>, vector<1x128x128xbf16>
    %30 = vector.shape_cast %29 : vector<1x128x128xbf16> to vector<128x128xbf16>
    %cst_20 = arith.constant dense<0.000000e+00> : vector<8x128xf32>
    %31 = tpu.matmul %28, %30, %cst_20 {dimension_numbers = #tpu.dot_dimension_numbers<[1], [0], [0], [1], [0, 0, 1, 1], [], []>} : vector<8x128xbf16>, vector<128x128xbf16>, vector<8x128xf32> -> vector<8x128xf32>
    %cst_21 = arith.constant 0.000000e+00 : f32
    %32 = vector.broadcast %cst_21 : f32 to vector<8x128xf32>
    %33 = arith.maximumf %31, %32 : vector<8x128xf32>
    %34 = arith.truncf %33 : vector<8x128xf32> to vector<8x128xbf16>
    %c4 = arith.constant 4 : index
    %c0_22 = arith.constant 0 : index
    %c0_23 = arith.constant 0 : index
    %35 = vector.load %arg4[%c4, %c0_22, %c0_23] : memref<8x128x128xbf16, #tpu.memory_space<vmem>>, vector<1x128x128xbf16>
    %36 = vector.shape_cast %35 : vector<1x128x128xbf16> to vector<128x128xbf16>
    %cst_24 = arith.constant dense<0.000000e+00> : vector<8x128xf32>
    %37 = tpu.matmul %34, %36, %cst_24 {dimension_numbers = #tpu.dot_dimension_numbers<[1], [0], [0], [1], [0, 0, 1, 1], [], []>} : vector<8x128xbf16>, vector<128x128xbf16>, vector<8x128xf32> -> vector<8x128xf32>
    %cst_25 = arith.constant 0.000000e+00 : f32
    %38 = vector.broadcast %cst_25 : f32 to vector<8x128xf32>
    %39 = arith.maximumf %37, %38 : vector<8x128xf32>
    %40 = arith.truncf %39 : vector<8x128xf32> to vector<8x128xbf16>
    %c5 = arith.constant 5 : index
    %c0_26 = arith.constant 0 : index
    %c0_27 = arith.constant 0 : index
    %41 = vector.load %arg4[%c5, %c0_26, %c0_27] : memref<8x128x128xbf16, #tpu.memory_space<vmem>>, vector<1x128x128xbf16>
    %42 = vector.shape_cast %41 : vector<1x128x128xbf16> to vector<128x128xbf16>
    %cst_28 = arith.constant dense<0.000000e+00> : vector<8x128xf32>
    %43 = tpu.matmul %40, %42, %cst_28 {dimension_numbers = #tpu.dot_dimension_numbers<[1], [0], [0], [1], [0, 0, 1, 1], [], []>} : vector<8x128xbf16>, vector<128x128xbf16>, vector<8x128xf32> -> vector<8x128xf32>
    %cst_29 = arith.constant 0.000000e+00 : f32
    %44 = vector.broadcast %cst_29 : f32 to vector<8x128xf32>
    %45 = arith.maximumf %43, %44 : vector<8x128xf32>
    %46 = arith.truncf %45 : vector<8x128xf32> to vector<8x128xbf16>
    %c6 = arith.constant 6 : index
    %c0_30 = arith.constant 0 : index
    %c0_31 = arith.constant 0 : index
    %47 = vector.load %arg4[%c6, %c0_30, %c0_31] : memref<8x128x128xbf16, #tpu.memory_space<vmem>>, vector<1x128x128xbf16>
    %48 = vector.shape_cast %47 : vector<1x128x128xbf16> to vector<128x128xbf16>
    %cst_32 = arith.constant dense<0.000000e+00> : vector<8x128xf32>
    %49 = tpu.matmul %46, %48, %cst_32 {dimension_numbers = #tpu.dot_dimension_numbers<[1], [0], [0], [1], [0, 0, 1, 1], [], []>} : vector<8x128xbf16>, vector<128x128xbf16>, vector<8x128xf32> -> vector<8x128xf32>
    %cst_33 = arith.constant 0.000000e+00 : f32
    %50 = vector.broadcast %cst_33 : f32 to vector<8x128xf32>
    %51 = arith.maximumf %49, %50 : vector<8x128xf32>
    %52 = arith.truncf %51 : vector<8x128xf32> to vector<8x128xbf16>
    %c7 = arith.constant 7 : index
    %c0_34 = arith.constant 0 : index
    %c0_35 = arith.constant 0 : index
    %53 = vector.load %arg4[%c7, %c0_34, %c0_35] : memref<8x128x128xbf16, #tpu.memory_space<vmem>>, vector<1x128x128xbf16>
    %54 = vector.shape_cast %53 : vector<1x128x128xbf16> to vector<128x128xbf16>
    %cst_36 = arith.constant dense<0.000000e+00> : vector<8x128xf32>
    %55 = tpu.matmul %52, %54, %cst_36 {dimension_numbers = #tpu.dot_dimension_numbers<[1], [0], [0], [1], [0, 0, 1, 1], [], []>} : vector<8x128xbf16>, vector<128x128xbf16>, vector<8x128xf32> -> vector<8x128xf32>
    %cst_37 = arith.constant 0.000000e+00 : f32
    %56 = vector.broadcast %cst_37 : f32 to vector<8x128xf32>
    %57 = arith.maximumf %55, %56 : vector<8x128xf32>
    %c0_38 = arith.constant 0 : index
    %c0_39 = arith.constant 0 : index
    %58 = vector.load %arg5[%c0_38, %c0_39] : memref<1x128xf32, #tpu.memory_space<vmem>>, vector<1x128xf32>
    %59 = vector.broadcast %58 : vector<1x128xf32> to vector<8x128xf32>
    %60 = arith.mulf %57, %59 : vector<8x128xf32>
    %cst_40 = arith.constant dense<0.000000e+00> : vector<8xf32>
    %61 = vector.multi_reduction <add>, %60, %cst_40 [1] : vector<8x128xf32> to vector<8xf32>
    %62 = vector.shape_cast %61 : vector<8xf32> to vector<8x1xf32>
    %c0_41 = arith.constant 0 : index
    %c0_42 = arith.constant 0 : index
    %63 = vector.load %arg6[%c0_41, %c0_42] : memref<8x1xf32, #tpu.memory_space<vmem>>, vector<8x1xf32>
    tpu.vector_store %arg6[%c0_41, %c0_42], %62 {strides = array<i32>} : memref<8x1xf32, #tpu.memory_space<vmem>>, vector<8x1xf32>,
    return
  }
  func.func @transform_0(%arg0: i32) -> (i32, i32) {
    %c0_i32 = arith.constant 0 : i32
    %c0_i32_0 = arith.constant 0 : i32
    return %arg0, %c0_i32 : i32, i32
  }
  func.func @transform_1(%arg0: i32) -> (i32, i32) {
    %c0_i32 = arith.constant 0 : i32
    %c0_i32_0 = arith.constant 0 : i32
    %c0_i32_1 = arith.constant 0 : i32
    return %c0_i32, %c0_i32_0 : i32, i32
  }
  func.func @transform_2(%arg0: i32) -> (i32, i32) {
    %c0_i32 = arith.constant 0 : i32
    %c0_i32_0 = arith.constant 0 : i32
    %c0_i32_1 = arith.constant 0 : i32
    return %c0_i32, %c0_i32_0 : i32, i32
  }
  func.func @transform_3(%arg0: i32) -> (i32, i32, i32) {
    %c0_i32 = arith.constant 0 : i32
    %c0_i32_0 = arith.constant 0 : i32
    %c0_i32_1 = arith.constant 0 : i32
    %c0_i32_2 = arith.constant 0 : i32
    return %c0_i32, %c0_i32_0, %c0_i32_1 : i32, i32, i32
  }
  func.func @transform_4(%arg0: i32) -> (i32, i32) {
    %c0_i32 = arith.constant 0 : i32
    %c0_i32_0 = arith.constant 0 : i32
    %c0_i32_1 = arith.constant 0 : i32
    return %c0_i32, %c0_i32_0 : i32, i32
  }
  func.func @transform_5(%arg0: i32) -> (i32, i32) {
    %c0_i32 = arith.constant 0 : i32
    %c0_i32_0 = arith.constant 0 : i32
    return %arg0, %c0_i32 : i32, i32
  }
}

</mosaic_0001>

<llo_original>
// kernel: tpu_custom_call.1
$region0: #{tpu_custom_call.1}
  #allocation0 [shape = 'u32[]', space=smem, size = 0x4, offset = 0x4, fixed_abs, tag = 'smem constant byte address 0x4 - core index']
  #allocation1 [shape = 'u32[72,128]{1,0:T(1,128)}', space=vmem, size = 0x9000, scoped, tag = 'internal scratch']
  %s0 = inlined_call_operand.vmem [shape: f32[8,1], index: 0, kind: input, shape index: {}]
  %s1 = inlined_call_operand.vmem [shape: f32[1,128], index: 1, kind: input, shape index: {}]
  %s2 = inlined_call_operand.vmem [shape: f32[1,128], index: 2, kind: input, shape index: {}]
  %s3 = inlined_call_operand.hbm [shape: bf16[8,128,128], index: 3, kind: input, shape index: {}]
  %s4 = inlined_call_operand.vmem [shape: f32[1,128], index: 4, kind: input, shape index: {}]
  %s5 = inlined_call_operand.vmem [shape: f32[8,1], index: 5, kind: output, shape index: {}]
  %s6 = sld [smem:[#allocation0]]
  $region34: #{tpu_custom_call.1} parent=0
    _
  %s8 = ssub.s32 1, %s6
  %s9 = scalar_select 0, %s8, %s6
  $region1: #{tpu_custom_call.1} parent=0
    #allocation2 [shape = 'u8[262144]{0}', space=vmem, size = 0x40000, scoped, tag = 'input window, operand 3, single buffered']
    #allocation3 [shape = 's32[1]{0}', space=sflag, size = 0x4, scoped, tag = 'scoped memory for tpu_custom_call.1']
    %10 = vsyncpa [#allocation3], 0
    // Predicated region
    $region2: #{tpu_custom_call.1} parent=1 // pred_check
      _
    $region3: #{tpu_custom_call.1} parent=1 // pred_check_branch
      %12 = sbr.rel (0) target = $region5
    $region4: #{tpu_custom_call.1} parent=1 // pred_region
      _
    $region5: #{tpu_custom_call.1} parent=1 // pred_fallthru
      _
    // Predicated region
    $region6: #{tpu_custom_call.1} parent=1 // pred_check
      _
    $region7: #{tpu_custom_call.1} parent=1 // pred_check_branch
      %14 = sbr.rel (0) target = $region9
    $region8: #{tpu_custom_call.1} parent=1 // pred_region
      _
    $region9: #{tpu_custom_call.1} parent=1 // pred_fallthru
      _
    // Predicated region
    $region10: #{tpu_custom_call.1} parent=1 // pred_check
      _
    $region11: #{tpu_custom_call.1} parent=1 // pred_check_branch
      %16 = sbr.rel (0) target = $region13
    $region12: #{tpu_custom_call.1} parent=1 // pred_region
      _
    $region13: #{tpu_custom_call.1} parent=1 // pred_fallthru
      _
    // Predicated region
    $region14: #{tpu_custom_call.1} parent=1 // pred_check
      _
    $region15: #{tpu_custom_call.1} parent=1 // pred_check_branch
      %18 = sbr.rel (0) target = $region17
    $region16: #{tpu_custom_call.1} parent=1 // pred_region
      %20 = vsyncadd [#allocation3], 0
      %s21 = sshll.u32 %s3, 4
      %s22 = int_to_ptr.hbm [resolvable:$true] %s21
      %s23 = sshll.u32 [#allocation2], 4
      %s24 = int_to_ptr.vmem [resolvable:$true] %s23
      %29 = dma.hbm_to_vmem [thread:$0]  %s22, 8192, %s24, [#allocation3], 64, 64, 4
    $region17: #{tpu_custom_call.1} parent=1 // pred_fallthru
      _
    // Predicated region
    $region18: #{tpu_custom_call.1} parent=1 // pred_check
      _
    $region19: #{tpu_custom_call.1} parent=1 // pred_check_branch
      %31 = sbr.rel (0) target = $region21
    $region20: #{tpu_custom_call.1} parent=1 // pred_region
      _
    $region21: #{tpu_custom_call.1} parent=1 // pred_fallthru
      _
    // Predicated region
    $region22: #{tpu_custom_call.1} parent=1 // pred_check
      _
    $region23: #{tpu_custom_call.1} parent=1 // pred_check_branch
      %33 = sbr.rel (0) target = $region25
    $region24: #{tpu_custom_call.1} parent=1 // pred_region
      %35 = dma.done [#allocation3], 8192
    $region25: #{tpu_custom_call.1} parent=1 // pred_fallthru
      _
    %v36 = vld [vmem:[%s0] sm:$0xff]
    %v37 = vld [vmem:[%s1] sm:$0x1]
    %39 = vset.pattern.permute.xlu0 0
    %40 = vperm.xlu0 %39, %v36
    %v41 = vpop.permute.xlu0 %40
    %v44 = vperm.slane %v37, 0
    %v46 = vmul.f32 %v41, %v44
    %v47 = vld [vmem:[%s2] sm:$0x1]
    %v49 = vperm.slane %v47, 0
    %v51 = vadd.f32 %v46, %v49
    %v52 = vmax.f32 %v51, 0.0
    %v53 = vpack.c.bf16 %v52, %v52
    %v54 = vld [vmem:[#allocation2] sm:$0xf]
    %v55 = vld [vmem:[#allocation2 + $0x4] sm:$0xf]
    %v56 = vld [vmem:[#allocation2 + $0x8] sm:$0xf]
    %v57 = vld [vmem:[#allocation2 + $0xc] sm:$0xf]
    %v58 = vld [vmem:[#allocation2 + $0x10] sm:$0xf]
    %v59 = vld [vmem:[#allocation2 + $0x14] sm:$0xf]
    %v60 = vld [vmem:[#allocation2 + $0x18] sm:$0xf]
    %v61 = vld [vmem:[#allocation2 + $0x1c] sm:$0xf]
    %v62 = vld [vmem:[#allocation2 + $0x20] sm:$0xf]
    %v63 = vld [vmem:[#allocation2 + $0x24] sm:$0xf]
    %v64 = vld [vmem:[#allocation2 + $0x28] sm:$0xf]
    %v65 = vld [vmem:[#allocation2 + $0x2c] sm:$0xf]
    %v66 = vld [vmem:[#allocation2 + $0x30] sm:$0xf]
    %v67 = vld [vmem:[#allocation2 + $0x34] sm:$0xf]
    %v68 = vld [vmem:[#allocation2 + $0x38] sm:$0xf]
    %v69 = vld [vmem:[#allocation2 + $0x3c] sm:$0xf]
    %v86 = vunpack.c.l.b16 %v54
    %v87 = vunpack.c.l.b16 %v55
    %v88 = vunpack.c.l.b16 %v56
    %v89 = vunpack.c.l.b16 %v57
    %v90 = vunpack.c.l.b16 %v58
    %v91 = vunpack.c.l.b16 %v59
    %v92 = vunpack.c.l.b16 %v60
    %v93 = vunpack.c.l.b16 %v61
    %v94 = vunpack.c.l.b16 %v62
    %v95 = vunpack.c.l.b16 %v63
    %v96 = vunpack.c.l.b16 %v64
    %v97 = vunpack.c.l.b16 %v65
    %v98 = vunpack.c.l.b16 %v66
    %v99 = vunpack.c.l.b16 %v67
    %v100 = vunpack.c.l.b16 %v68
    %v101 = vunpack.c.l.b16 %v69
    %v102 = vpack.c.b16 %v87, %v86
    %v103 = vpack.c.b16 %v89, %v88
    %v104 = vpack.c.b16 %v91, %v90
    %v105 = vpack.c.b16 %v93, %v92
    %v106 = vpack.c.b16 %v95, %v94
    %v107 = vpack.c.b16 %v97, %v96
    %v108 = vpack.c.b16 %v99, %v98
    %v109 = vpack.c.b16 %v101, %v100
    %118 = vmatpush.bf16.msra.mxu0 %v109
    %119 = vmatpush.bf16.msra.mxu0 %v108
    %120 = vmatpush.bf16.msra.mxu0 %v107
    %121 = vmatpush.bf16.msra.mxu0 %v106
    %122 = vmatpush.bf16.msra.mxu0 %v105
    %123 = vmatpush.bf16.msra.mxu0 %v104
    %124 = vmatpush.bf16.msra.mxu0 %v103
    %125 = vmatpush.bf16.msra.mxu0 %v102
    %126 = vmatmul.bf16.gmra.mxu0 %v53
    %v127 = vpop.f32.mrf.mxu0
    %v128 = vadd.f32 0.0, %v127
    %v129 = vpop.f32.mrf.mxu0
    %130 = vdwg.mxu0
    %v131 = vmax.f32 %v128, 0.0
    %v132 = vpack.c.bf16 %v131, %v131
    %s133 = scalar_lea.vmem [#allocation2], 64
    %v134 = vld [vmem:[%s133] sm:$0xf]
    %v135 = vld [vmem:[%s133 + $0x4] sm:$0xf]
    %v136 = vld [vmem:[%s133 + $0x8] sm:$0xf]
    %v137 = vld [vmem:[%s133 + $0xc] sm:$0xf]
    %v138 = vld [vmem:[%s133 + $0x10] sm:$0xf]
    %v139 = vld [vmem:[%s133 + $0x14] sm:$0xf]
    %v140 = vld [vmem:[%s133 + $0x18] sm:$0xf]
    %v141 = vld [vmem:[%s133 + $0x1c] sm:$0xf]
    %v142 = vld [vmem:[%s133 + $0x20] sm:$0xf]
    %v143 = vld [vmem:[%s133 + $0x24] sm:$0xf]
    %v144 = vld [vmem:[%s133 + $0x28] sm:$0xf]
    %v145 = vld [vmem:[%s133 + $0x2c] sm:$0xf]
    %v146 = vld [vmem:[%s133 + $0x30] sm:$0xf]
    %v147 = vld [vmem:[%s133 + $0x34] sm:$0xf]
    %v148 = vld [vmem:[%s133 + $0x38] sm:$0xf]
    %v149 = vld [vmem:[%s133 + $0x3c] sm:$0xf]
    %v166 = vunpack.c.l.b16 %v134
    %v167 = vunpack.c.l.b16 %v135
    %v168 = vunpack.c.l.b16 %v136
    %v169 = vunpack.c.l.b16 %v137
    %v170 = vunpack.c.l.b16 %v138
    %v171 = vunpack.c.l.b16 %v139
    %v172 = vunpack.c.l.b16 %v140
    %v173 = vunpack.c.l.b16 %v141
    %v174 = vunpack.c.l.b16 %v142
    %v175 = vunpack.c.l.b16 %v143
    %v176 = vunpack.c.l.b16 %v144
    %v177 = vunpack.c.l.b16 %v145
    %v178 = vunpack.c.l.b16 %v146
    %v179 = vunpack.c.l.b16 %v147
    %v180 = vunpack.c.l.b16 %v148
    %v181 = vunpack.c.l.b16 %v149
    %v182 = vpack.c.b16 %v167, %v166
    %v183 = vpack.c.b16 %v169, %v168
    %v184 = vpack.c.b16 %v171, %v170
    %v185 = vpack.c.b16 %v173, %v172
    %v186 = vpack.c.b16 %v175, %v174
    %v187 = vpack.c.b16 %v177, %v176
    %v188 = vpack.c.b16 %v179, %v178
    %v189 = vpack.c.b16 %v181, %v180
    %198 = vmatpush.bf16.msra.mxu0 %v189
    %199 = vmatpush.bf16.msra.mxu0 %v188
    %200 = vmatpush.bf16.msra.mxu0 %v187
    %201 = vmatpush.bf16.msra.mxu0 %v186
    %202 = vmatpush.bf16.msra.mxu0 %v185
    %203 = vmatpush.bf16.msra.mxu0 %v184
    %204 = vmatpush.bf16.msra.mxu0 %v183
    %205 = vmatpush.bf16.msra.mxu0 %v182
    %206 = vmatmul.bf16.gmra.mxu0 %v132
    %v207 = vpop.f32.mrf.mxu0
    %v208 = vadd.f32 0.0, %v207
    %v209 = vpop.f32.mrf.mxu0
    %210 = vdwg.mxu0
    %v211 = vmax.f32 %v208, 0.0
    %v212 = vpack.c.bf16 %v211, %v211
    %s213 = scalar_lea.vmem [#allocation2], 128
    %v214 = vld [vmem:[%s213] sm:$0xf]
    %v215 = vld [vmem:[%s213 + $0x4] sm:$0xf]
    %v216 = vld [vmem:[%s213 + $0x8] sm:$0xf]
    %v217 = vld [vmem:[%s213 + $0xc] sm:$0xf]
    %v218 = vld [vmem:[%s213 + $0x10] sm:$0xf]
    %v219 = vld [vmem:[%s213 + $0x14] sm:$0xf]
    %v220 = vld [vmem:[%s213 + $0x18] sm:$0xf]
    %v221 = vld [vmem:[%s213 + $0x1c] sm:$0xf]
    %v222 = vld [vmem:[%s213 + $0x20] sm:$0xf]
    %v223 = vld [vmem:[%s213 + $0x24] sm:$0xf]
    %v224 = vld [vmem:[%s213 + $0x28] sm:$0xf]
    %v225 = vld [vmem:[%s213 + $0x2c] sm:$0xf]
    %v226 = vld [vmem:[%s213 + $0x30] sm:$0xf]
    %v227 = vld [vmem:[%s213 + $0x34] sm:$0xf]
    %v228 = vld [vmem:[%s213 + $0x38] sm:$0xf]
    %v229 = vld [vmem:[%s213 + $0x3c] sm:$0xf]
    %v246 = vunpack.c.l.b16 %v214
    %v247 = vunpack.c.l.b16 %v215
    %v248 = vunpack.c.l.b16 %v216
    %v249 = vunpack.c.l.b16 %v217
    %v250 = vunpack.c.l.b16 %v218
    %v251 = vunpack.c.l.b16 %v219
    %v252 = vunpack.c.l.b16 %v220
    %v253 = vunpack.c.l.b16 %v221
    %v254 = vunpack.c.l.b16 %v222
    %v255 = vunpack.c.l.b16 %v223
    %v256 = vunpack.c.l.b16 %v224
    %v257 = vunpack.c.l.b16 %v225
    %v258 = vunpack.c.l.b16 %v226
    %v259 = vunpack.c.l.b16 %v227
    %v260 = vunpack.c.l.b16 %v228
    %v261 = vunpack.c.l.b16 %v229
    %v262 = vpack.c.b16 %v247, %v246
    %v263 = vpack.c.b16 %v249, %v248
    %v264 = vpack.c.b16 %v251, %v250
    %v265 = vpack.c.b16 %v253, %v252
    %v266 = vpack.c.b16 %v255, %v254
    %v267 = vpack.c.b16 %v257, %v256
    %v268 = vpack.c.b16 %v259, %v258
    %v269 = vpack.c.b16 %v261, %v260
    %278 = vmatpush.bf16.msra.mxu0 %v269
    %279 = vmatpush.bf16.msra.mxu0 %v268
    %280 = vmatpush.bf16.msra.mxu0 %v267
    %281 = vmatpush.bf16.msra.mxu0 %v266
    %282 = vmatpush.bf16.msra.mxu0 %v265
    %283 = vmatpush.bf16.msra.mxu0 %v264
    %284 = vmatpush.bf16.msra.mxu0 %v263
    %285 = vmatpush.bf16.msra.mxu0 %v262
    %286 = vmatmul.bf16.gmra.mxu0 %v212
    %v287 = vpop.f32.mrf.mxu0
    %v288 = vadd.f32 0.0, %v287
    %v289 = vpop.f32.mrf.mxu0
    %290 = vdwg.mxu0
    %v291 = vmax.f32 %v288, 0.0
    %v292 = vpack.c.bf16 %v291, %v291
    %s293 = scalar_lea.vmem [#allocation2], 192
    %v294 = vld [vmem:[%s293] sm:$0xf]
    %v295 = vld [vmem:[%s293 + $0x4] sm:$0xf]
    %v296 = vld [vmem:[%s293 + $0x8] sm:$0xf]
    %v297 = vld [vmem:[%s293 + $0xc] sm:$0xf]
    %v298 = vld [vmem:[%s293 + $0x10] sm:$0xf]
    %v299 = vld [vmem:[%s293 + $0x14] sm:$0xf]
    %v300 = vld [vmem:[%s293 + $0x18] sm:$0xf]
    %v301 = vld [vmem:[%s293 + $0x1c] sm:$0xf]
    %v302 = vld [vmem:[%s293 + $0x20] sm:$0xf]
    %v303 = vld [vmem:[%s293 + $0x24] sm:$0xf]
    %v304 = vld [vmem:[%s293 + $0x28] sm:$0xf]
    %v305 = vld [vmem:[%s293 + $0x2c] sm:$0xf]
    %v306 = vld [vmem:[%s293 + $0x30] sm:$0xf]
    %v307 = vld [vmem:[%s293 + $0x34] sm:$0xf]
    %v308 = vld [vmem:[%s293 + $0x38] sm:$0xf]
    %v309 = vld [vmem:[%s293 + $0x3c] sm:$0xf]
    %v326 = vunpack.c.l.b16 %v294
    %v327 = vunpack.c.l.b16 %v295
    %v328 = vunpack.c.l.b16 %v296
    %v329 = vunpack.c.l.b16 %v297
    %v330 = vunpack.c.l.b16 %v298
    %v331 = vunpack.c.l.b16 %v299
    %v332 = vunpack.c.l.b16 %v300
    %v333 = vunpack.c.l.b16 %v301
    %v334 = vunpack.c.l.b16 %v302
    %v335 = vunpack.c.l.b16 %v303
    %v336 = vunpack.c.l.b16 %v304
    %v337 = vunpack.c.l.b16 %v305
    %v338 = vunpack.c.l.b16 %v306
    %v339 = vunpack.c.l.b16 %v307
    %v340 = vunpack.c.l.b16 %v308
    %v341 = vunpack.c.l.b16 %v309
    %v342 = vpack.c.b16 %v327, %v326
    %v343 = vpack.c.b16 %v329, %v328
    %v344 = vpack.c.b16 %v331, %v330
    %v345 = vpack.c.b16 %v333, %v332
    %v346 = vpack.c.b16 %v335, %v334
    %v347 = vpack.c.b16 %v337, %v336
    %v348 = vpack.c.b16 %v339, %v338
    %v349 = vpack.c.b16 %v341, %v340
    %358 = vmatpush.bf16.msra.mxu0 %v349
    %359 = vmatpush.bf16.msra.mxu0 %v348
    %360 = vmatpush.bf16.msra.mxu0 %v347
    %361 = vmatpush.bf16.msra.mxu0 %v346
    %362 = vmatpush.bf16.msra.mxu0 %v345
    %363 = vmatpush.bf16.msra.mxu0 %v344
    %364 = vmatpush.bf16.msra.mxu0 %v343
    %365 = vmatpush.bf16.msra.mxu0 %v342
    %366 = vmatmul.bf16.gmra.mxu0 %v292
    %v367 = vpop.f32.mrf.mxu0
    %v368 = vadd.f32 0.0, %v367
    %v369 = vpop.f32.mrf.mxu0
    %370 = vdwg.mxu0
    %v371 = vmax.f32 %v368, 0.0
    %v372 = vpack.c.bf16 %v371, %v371
    %s373 = scalar_lea.vmem [#allocation2], 256
    %v374 = vld [vmem:[%s373] sm:$0xf]
    %v375 = vld [vmem:[%s373 + $0x4] sm:$0xf]
    %v376 = vld [vmem:[%s373 + $0x8] sm:$0xf]
    %v377 = vld [vmem:[%s373 + $0xc] sm:$0xf]
    %v378 = vld [vmem:[%s373 + $0x10] sm:$0xf]
    %v379 = vld [vmem:[%s373 + $0x14] sm:$0xf]
    %v380 = vld [vmem:[%s373 + $0x18] sm:$0xf]
    %v381 = vld [vmem:[%s373 + $0x1c] sm:$0xf]
    %v382 = vld [vmem:[%s373 + $0x20] sm:$0xf]
    %v383 = vld [vmem:[%s373 + $0x24] sm:$0xf]
    %v384 = vld [vmem:[%s373 + $0x28] sm:$0xf]
    %v385 = vld [vmem:[%s373 + $0x2c] sm:$0xf]
    %v386 = vld [vmem:[%s373 + $0x30] sm:$0xf]
    %v387 = vld [vmem:[%s373 + $0x34] sm:$0xf]
    %v388 = vld [vmem:[%s373 + $0x38] sm:$0xf]
    %v389 = vld [vmem:[%s373 + $0x3c] sm:$0xf]
    %v406 = vunpack.c.l.b16 %v374
    %v407 = vunpack.c.l.b16 %v375
    %v408 = vunpack.c.l.b16 %v376
    %v409 = vunpack.c.l.b16 %v377
    %v410 = vunpack.c.l.b16 %v378
    %v411 = vunpack.c.l.b16 %v379
    %v412 = vunpack.c.l.b16 %v380
    %v413 = vunpack.c.l.b16 %v381
    %v414 = vunpack.c.l.b16 %v382
    %v415 = vunpack.c.l.b16 %v383
    %v416 = vunpack.c.l.b16 %v384
    %v417 = vunpack.c.l.b16 %v385
    %v418 = vunpack.c.l.b16 %v386
    %v419 = vunpack.c.l.b16 %v387
    %v420 = vunpack.c.l.b16 %v388
    %v421 = vunpack.c.l.b16 %v389
    %v422 = vpack.c.b16 %v407, %v406
    %v423 = vpack.c.b16 %v409, %v408
    %v424 = vpack.c.b16 %v411, %v410
    %v425 = vpack.c.b16 %v413, %v412
    %v426 = vpack.c.b16 %v415, %v414
    %v427 = vpack.c.b16 %v417, %v416
    %v428 = vpack.c.b16 %v419, %v418
    %v429 = vpack.c.b16 %v421, %v420
    %438 = vmatpush.bf16.msra.mxu0 %v429
    %439 = vmatpush.bf16.msra.mxu0 %v428
    %440 = vmatpush.bf16.msra.mxu0 %v427
    %441 = vmatpush.bf16.msra.mxu0 %v426
    %442 = vmatpush.bf16.msra.mxu0 %v425
    %443 = vmatpush.bf16.msra.mxu0 %v424
    %444 = vmatpush.bf16.msra.mxu0 %v423
    %445 = vmatpush.bf16.msra.mxu0 %v422
    %446 = vmatmul.bf16.gmra.mxu0 %v372
    %v447 = vpop.f32.mrf.mxu0
    %v448 = vadd.f32 0.0, %v447
    %v449 = vpop.f32.mrf.mxu0
    %450 = vdwg.mxu0
    %v451 = vmax.f32 %v448, 0.0
    %v452 = vpack.c.bf16 %v451, %v451
    %s453 = scalar_lea.vmem [#allocation2], 320
    %v454 = vld [vmem:[%s453] sm:$0xf]
    %v455 = vld [vmem:[%s453 + $0x4] sm:$0xf]
    %v456 = vld [vmem:[%s453 + $0x8] sm:$0xf]
    %v457 = vld [vmem:[%s453 + $0xc] sm:$0xf]
    %v458 = vld [vmem:[%s453 + $0x10] sm:$0xf]
    %v459 = vld [vmem:[%s453 + $0x14] sm:$0xf]
    %v460 = vld [vmem:[%s453 + $0x18] sm:$0xf]
    %v461 = vld [vmem:[%s453 + $0x1c] sm:$0xf]
    %v462 = vld [vmem:[%s453 + $0x20] sm:$0xf]
    %v463 = vld [vmem:[%s453 + $0x24] sm:$0xf]
    %v464 = vld [vmem:[%s453 + $0x28] sm:$0xf]
    %v465 = vld [vmem:[%s453 + $0x2c] sm:$0xf]
    %v466 = vld [vmem:[%s453 + $0x30] sm:$0xf]
    %v467 = vld [vmem:[%s453 + $0x34] sm:$0xf]
    %v468 = vld [vmem:[%s453 + $0x38] sm:$0xf]
    %v469 = vld [vmem:[%s453 + $0x3c] sm:$0xf]
    %v486 = vunpack.c.l.b16 %v454
    %v487 = vunpack.c.l.b16 %v455
    %v488 = vunpack.c.l.b16 %v456
    %v489 = vunpack.c.l.b16 %v457
    %v490 = vunpack.c.l.b16 %v458
    %v491 = vunpack.c.l.b16 %v459
    %v492 = vunpack.c.l.b16 %v460
    %v493 = vunpack.c.l.b16 %v461
    %v494 = vunpack.c.l.b16 %v462
    %v495 = vunpack.c.l.b16 %v463
    %v496 = vunpack.c.l.b16 %v464
    %v497 = vunpack.c.l.b16 %v465
    %v498 = vunpack.c.l.b16 %v466
    %v499 = vunpack.c.l.b16 %v467
    %v500 = vunpack.c.l.b16 %v468
    %v501 = vunpack.c.l.b16 %v469
    %v502 = vpack.c.b16 %v487, %v486
    %v503 = vpack.c.b16 %v489, %v488
    %v504 = vpack.c.b16 %v491, %v490
    %v505 = vpack.c.b16 %v493, %v492
    %v506 = vpack.c.b16 %v495, %v494
    %v507 = vpack.c.b16 %v497, %v496
    %v508 = vpack.c.b16 %v499, %v498
    %v509 = vpack.c.b16 %v501, %v500
    %518 = vmatpush.bf16.msra.mxu0 %v509
    %519 = vmatpush.bf16.msra.mxu0 %v508
    %520 = vmatpush.bf16.msra.mxu0 %v507
    %521 = vmatpush.bf16.msra.mxu0 %v506
    %522 = vmatpush.bf16.msra.mxu0 %v505
    %523 = vmatpush.bf16.msra.mxu0 %v504
    %524 = vmatpush.bf16.msra.mxu0 %v503
    %525 = vmatpush.bf16.msra.mxu0 %v502
    %526 = vmatmul.bf16.gmra.mxu0 %v452
    %v527 = vpop.f32.mrf.mxu0
    %v528 = vadd.f32 0.0, %v527
    %v529 = vpop.f32.mrf.mxu0
    %530 = vdwg.mxu0
    %v531 = vmax.f32 %v528, 0.0
    %v532 = vpack.c.bf16 %v531, %v531
    %s533 = scalar_lea.vmem [#allocation2], 384
    %v534 = vld [vmem:[%s533] sm:$0xf]
    %v535 = vld [vmem:[%s533 + $0x4] sm:$0xf]
    %v536 = vld [vmem:[%s533 + $0x8] sm:$0xf]
    %v537 = vld [vmem:[%s533 + $0xc] sm:$0xf]
    %v538 = vld [vmem:[%s533 + $0x10] sm:$0xf]
    %v539 = vld [vmem:[%s533 + $0x14] sm:$0xf]
    %v540 = vld [vmem:[%s533 + $0x18] sm:$0xf]
    %v541 = vld [vmem:[%s533 + $0x1c] sm:$0xf]
    %v542 = vld [vmem:[%s533 + $0x20] sm:$0xf]
    %v543 = vld [vmem:[%s533 + $0x24] sm:$0xf]
    %v544 = vld [vmem:[%s533 + $0x28] sm:$0xf]
    %v545 = vld [vmem:[%s533 + $0x2c] sm:$0xf]
    %v546 = vld [vmem:[%s533 + $0x30] sm:$0xf]
    %v547 = vld [vmem:[%s533 + $0x34] sm:$0xf]
    %v548 = vld [vmem:[%s533 + $0x38] sm:$0xf]
    %v549 = vld [vmem:[%s533 + $0x3c] sm:$0xf]
    %v566 = vunpack.c.l.b16 %v534
    %v567 = vunpack.c.l.b16 %v535
    %v568 = vunpack.c.l.b16 %v536
    %v569 = vunpack.c.l.b16 %v537
    %v570 = vunpack.c.l.b16 %v538
    %v571 = vunpack.c.l.b16 %v539
    %v572 = vunpack.c.l.b16 %v540
    %v573 = vunpack.c.l.b16 %v541
    %v574 = vunpack.c.l.b16 %v542
    %v575 = vunpack.c.l.b16 %v543
    %v576 = vunpack.c.l.b16 %v544
    %v577 = vunpack.c.l.b16 %v545
    %v578 = vunpack.c.l.b16 %v546
    %v579 = vunpack.c.l.b16 %v547
    %v580 = vunpack.c.l.b16 %v548
    %v581 = vunpack.c.l.b16 %v549
    %v582 = vpack.c.b16 %v567, %v566
    %v583 = vpack.c.b16 %v569, %v568
    %v584 = vpack.c.b16 %v571, %v570
    %v585 = vpack.c.b16 %v573, %v572
    %v586 = vpack.c.b16 %v575, %v574
    %v587 = vpack.c.b16 %v577, %v576
    %v588 = vpack.c.b16 %v579, %v578
    %v589 = vpack.c.b16 %v581, %v580
    %598 = vmatpush.bf16.msra.mxu0 %v589
    %599 = vmatpush.bf16.msra.mxu0 %v588
    %600 = vmatpush.bf16.msra.mxu0 %v587
    %601 = vmatpush.bf16.msra.mxu0 %v586
    %602 = vmatpush.bf16.msra.mxu0 %v585
    %603 = vmatpush.bf16.msra.mxu0 %v584
    %604 = vmatpush.bf16.msra.mxu0 %v583
    %605 = vmatpush.bf16.msra.mxu0 %v582
    %606 = vmatmul.bf16.gmra.mxu0 %v532
    %v607 = vpop.f32.mrf.mxu0
    %v608 = vadd.f32 0.0, %v607
    %v609 = vpop.f32.mrf.mxu0
    %610 = vdwg.mxu0
    %v611 = vmax.f32 %v608, 0.0
    %v612 = vpack.c.bf16 %v611, %v611
    %s613 = scalar_lea.vmem [#allocation2], 448
    %v614 = vld [vmem:[%s613] sm:$0xf]
    %v615 = vld [vmem:[%s613 + $0x4] sm:$0xf]
    %v616 = vld [vmem:[%s613 + $0x8] sm:$0xf]
    %v617 = vld [vmem:[%s613 + $0xc] sm:$0xf]
    %v618 = vld [vmem:[%s613 + $0x10] sm:$0xf]
    %v619 = vld [vmem:[%s613 + $0x14] sm:$0xf]
    %v620 = vld [vmem:[%s613 + $0x18] sm:$0xf]
    %v621 = vld [vmem:[%s613 + $0x1c] sm:$0xf]
    %v622 = vld [vmem:[%s613 + $0x20] sm:$0xf]
    %v623 = vld [vmem:[%s613 + $0x24] sm:$0xf]
    %v624 = vld [vmem:[%s613 + $0x28] sm:$0xf]
    %v625 = vld [vmem:[%s613 + $0x2c] sm:$0xf]
    %v626 = vld [vmem:[%s613 + $0x30] sm:$0xf]
    %v627 = vld [vmem:[%s613 + $0x34] sm:$0xf]
    %v628 = vld [vmem:[%s613 + $0x38] sm:$0xf]
    %v629 = vld [vmem:[%s613 + $0x3c] sm:$0xf]
    %v646 = vunpack.c.l.b16 %v614
    %v647 = vunpack.c.l.b16 %v615
    %v648 = vunpack.c.l.b16 %v616
    %v649 = vunpack.c.l.b16 %v617
    %v650 = vunpack.c.l.b16 %v618
    %v651 = vunpack.c.l.b16 %v619
    %v652 = vunpack.c.l.b16 %v620
    %v653 = vunpack.c.l.b16 %v621
    %v654 = vunpack.c.l.b16 %v622
    %v655 = vunpack.c.l.b16 %v623
    %v656 = vunpack.c.l.b16 %v624
    %v657 = vunpack.c.l.b16 %v625
    %v658 = vunpack.c.l.b16 %v626
    %v659 = vunpack.c.l.b16 %v627
    %v660 = vunpack.c.l.b16 %v628
    %v661 = vunpack.c.l.b16 %v629
    %v662 = vpack.c.b16 %v647, %v646
    %v663 = vpack.c.b16 %v649, %v648
    %v664 = vpack.c.b16 %v651, %v650
    %v665 = vpack.c.b16 %v653, %v652
    %v666 = vpack.c.b16 %v655, %v654
    %v667 = vpack.c.b16 %v657, %v656
    %v668 = vpack.c.b16 %v659, %v658
    %v669 = vpack.c.b16 %v661, %v660
    %678 = vmatpush.bf16.msra.mxu0 %v669
    %679 = vmatpush.bf16.msra.mxu0 %v668
    %680 = vmatpush.bf16.msra.mxu0 %v667
    %681 = vmatpush.bf16.msra.mxu0 %v666
    %682 = vmatpush.bf16.msra.mxu0 %v665
    %683 = vmatpush.bf16.msra.mxu0 %v664
    %684 = vmatpush.bf16.msra.mxu0 %v663
    %685 = vmatpush.bf16.msra.mxu0 %v662
    %686 = vmatmul.bf16.gmra.mxu0 %v612
    %v687 = vpop.f32.mrf.mxu0
    %v688 = vadd.f32 0.0, %v687
    %v689 = vpop.f32.mrf.mxu0
    %690 = vdwg.mxu0
    %v691 = vmax.f32 %v688, 0.0
    %v692 = vld [vmem:[%s4] sm:$0x1]
    %v694 = vperm.slane %v692, 0
    %v696 = vmul.f32 %v691, %v694
    %697 = vadd.xlane.f32.xlu0 %v696
    %v698 = vpop.xlane.xlu0 %697
    %vm699 = vcmask 7168
    %700 = vst.msk [vmem:[%s5] sm:$0xff] %vm699, %v698
    // Predicated region
    $region26: #{tpu_custom_call.1} parent=1 // pred_check
      _
    $region27: #{tpu_custom_call.1} parent=1 // pred_check_branch
      %702 = sbr.rel (0) target = $region29
    $region28: #{tpu_custom_call.1} parent=1 // pred_region
      _
    $region29: #{tpu_custom_call.1} parent=1 // pred_fallthru
      _
    // Predicated region
    $region30: #{tpu_custom_call.1} parent=1 // pred_check
      _
    $region31: #{tpu_custom_call.1} parent=1 // pred_check_branch
      %704 = sbr.rel (0) target = $region33
    $region32: #{tpu_custom_call.1} parent=1 // pred_region
      _
    $region33: #{tpu_custom_call.1} parent=1 // pred_fallthru
      _
    %705 = vsyncpa [#allocation3], 1

</llo_original>
